<compile_context>
chip_gen: v7x
topology: tpu7x:2x2x1
jax: 0.10.0
libtpu: 0.0.40
codegen_flags: <defaults>
</compile_context>

<pallas_src>
import functools

import jax
import jax.numpy as jnp
from jax.experimental import pallas as pl
from jax.experimental.pallas import tpu as pltpu


def _dice_partials_kernel(x_ref, t_ref, o_ref, *, has_pad: bool):
    # x_ref: (C, TILE_R, 128) logits tile (native dtype)
    # t_ref: (TILE_R, 128) int32 labels (-1 marks padded pixels when has_pad)
    # o_ref: (1, 3, C, 128) f32 per-lane partial sums [inter, sum(p), sum(onehot)],
    #        accumulated across the pixel grid axis (same output block for all p).
    p_idx = pl.program_id(1)

    x = x_ref[...].astype(jnp.float32)            # (C, TR, 128)
    t = t_ref[...]                                # (TR, 128) int32

    # Softmax over the class axis (axis 0): pure VPU elementwise + one EUP exp,
    # normalized with a single reciprocal per pixel (exact, not approx).
    m = jnp.max(x, axis=0, keepdims=True)         # (1, TR, 128)
    e = jnp.exp(x - m)                            # (C, TR, 128)
    s = jnp.sum(e, axis=0, keepdims=True)         # (1, TR, 128)
    prob = e * (1.0 / s)                          # (C, TR, 128)

    if has_pad:
        # Zero the probabilities of padded pixels so sum(p) is unaffected by padding.
        prob = jnp.where((t >= 0)[None, :, :], prob, 0.0)

    # Boolean class mask instead of a materialized one-hot tensor; pad label (-1)
    # never matches a class, so intersection / one-hot sums need no extra masking.
    cls = jax.lax.broadcasted_iota(jnp.int32, x.shape, 0)    # (C, TR, 128)
    mask = t[None, :, :] == cls                              # (C, TR, 128) bool
    maskf = mask.astype(jnp.float32)

    # Sublane-only folds to per-lane partials; the 128-lane reduce is deferred to
    # the wrapper (done once), keeping XLU work out of the hot loop.
    inter_p = jnp.sum(jnp.where(mask, prob, 0.0), axis=1)    # (C, 128)
    isum_p = jnp.sum(prob, axis=1)                           # (C, 128)
    jsum_p = jnp.sum(maskf, axis=1)                          # (C, 128)

    @pl.when(p_idx == 0)
    def _init():
        o_ref[...] = jnp.zeros_like(o_ref)

    o_ref[0, 0, :, :] += inter_p
    o_ref[0, 1, :, :] += isum_p
    o_ref[0, 2, :, :] += jsum_p


def _pick_tile_rows(C, R, itemsize, target_bytes=6 * 1024 * 1024):
    """Largest TILE_R that divides R, respects the dtype's minimum sublane tile
    (8 for f32, 16 for bf16, 32 for 8-bit), and keeps the logits block
    (C * TILE_R * 128 * itemsize bytes) under ~target_bytes. Falls back to the
    full-dim escape (TILE_R == R) when no such multiple exists."""
    g = max(8, 32 // max(int(itemsize), 1))
    row_bytes = C * 128 * int(itemsize)
    max_rows = max(1, target_bytes // row_bytes)
    cands = [r for r in range(g, R + 1, g) if R % r == 0]
    if not cands:
        return R
    fit = [r for r in cands if r <= max_rows]
    return max(fit) if fit else min(cands)


def multiclass_dice_loss(inp, target, tile_rows=None):
    """inp: (N, C, H, W) float logits, target: (N, H, W) int labels in [0, C)."""
    N, C, H, W = inp.shape
    P = H * W
    pad = (-P) % 128
    Pp = P + pad
    R = Pp // 128

    # Lane-dense pixel layout; keep the native logits dtype (no wrapper upcast).
    x = inp.reshape(N, C, P)
    t = target.reshape(N, P).astype(jnp.int32)
    if pad:
        x = jnp.pad(x, ((0, 0), (0, 0), (0, pad)))
        t = jnp.pad(t, ((0, 0), (0, pad)), constant_values=-1)
    x = x.reshape(N, C, R, 128)
    t = t.reshape(N, R, 128)

    itemsize = jnp.dtype(x.dtype).itemsize
    if tile_rows is None:
        tile_rows = _pick_tile_rows(C, R, itemsize)
    assert R % tile_rows == 0, (tile_rows, R)

    grid = (N, R // tile_rows)

    # VMEM footprint (inputs double-buffered) -> consistent vmem limit.
    x_block = C * tile_rows * 128 * itemsize
    t_block = tile_rows * 128 * 4
    o_block = 3 * C * 128 * 4
    vmem_limit = int(max(32 << 20, min(64 << 20, 2 * (x_block + t_block + o_block) + (16 << 20))))

    kernel = functools.partial(_dice_partials_kernel, has_pad=pad > 0)

    parts = pl.pallas_call(
        kernel,
        out_shape=jax.ShapeDtypeStruct((N, 3, C, 128), jnp.float32),
        grid_spec=pltpu.PrefetchScalarGridSpec(
            num_scalar_prefetch=0,
            grid=grid,
            in_specs=[
                # Logits: kernel sees (C, TILE_R, 128), native dtype.
                pl.BlockSpec((pl.Squeezed(), C, tile_rows, 128),
                             lambda n, p: (n, 0, p, 0)),
                # Labels: kernel sees (TILE_R, 128), int32.
                pl.BlockSpec((pl.Squeezed(), tile_rows, 128),
                             lambda n, p: (n, p, 0)),
            ],
            # Per-batch-slice partials, accumulated across the (arbitrary) pixel axis.
            out_specs=pl.BlockSpec((1, 3, C, 128), lambda n, p: (n, 0, 0, 0)),
        ),
        compiler_params=pltpu.CompilerParams(
            dimension_semantics=("parallel", "arbitrary"),
            vmem_limit_bytes=vmem_limit,
        ),
    )(x, t)

    # Final fold (tiny): sum partials over batch slices and lanes, then dice per class.
    sums = jnp.sum(parts, axis=(0, 3))                  # (3, C)
    inter, isum, jsum = sums[0], sums[1], sums[2]
    score = (2.0 * inter) / (isum + jsum)               # smooth = 0.0
    return jnp.sum(1.0 - score)


def _reference(inp, target):
    # Pure-JAX reference replicating the PyTorch module exactly (weights=None, smooth=0).
    N, C, H, W = inp.shape
    p = jax.nn.softmax(inp.astype(jnp.float32), axis=1)          # (N, C, H, W)
    oh = jax.nn.one_hot(target, C, dtype=jnp.float32)            # (N, H, W, C)
    oh = jnp.transpose(oh, (0, 3, 1, 2))                         # (N, C, H, W)
    total = jnp.float32(0.0)
    for i in range(C):
        pi = p[:, i]
        ti = oh[:, i]
        inter = jnp.sum(pi * ti)
        score = (2.0 * inter) / (jnp.sum(pi) + jnp.sum(ti))
        total = total + (1.0 - score)
    return total


if __name__ == "__main__":
    key = jax.random.PRNGKey(0)

    def run_check(k, N, C, H, W, dtype=jnp.float32, tile_rows=None):
        k1, k2 = jax.random.split(k)
        inp = jax.random.normal(k1, (N, C, H, W), dtype=dtype)
        target = jax.random.randint(k2, (N, H, W), 0, C, dtype=jnp.int32)
        loss = jax.block_until_ready(multiclass_dice_loss(inp, target, tile_rows=tile_rows))
        ref = jax.block_until_ready(_reference(inp, target))
        assert jnp.allclose(loss, ref, atol=1e-5, rtol=1e-5), (loss, ref, (N, C, H, W, dtype))

    keys = jax.random.split(key, 4)
    # Main spec-sized case: (2, 4, 16, 16) f32, single pixel step per batch slice.
    run_check(keys[0], 2, 4, 16, 16)
    # Multi-step pixel accumulation path (R=16, tile_rows=8 -> pixel grid axis of 2).
    run_check(keys[1], 2, 4, 64, 32, tile_rows=8)
    # Non-multiple-of-128 pixel count: exercises padding + validity mask.
    run_check(keys[2], 1, 3, 12, 12)
    # bf16 ingestion (no wrapper upcast), 16-row sublane granularity via the tile picker.
    run_check(keys[3], 2, 4, 64, 32, dtype=jnp.bfloat16)

    print("KERNEL_OK")
</pallas_src>

<mosaic_0001>
module attributes {stable_mosaic.version = 11 : i64} {
  func.func @_dice_partials_kernel(%arg0: i32, %arg1: i32, %arg2: memref<1x4x2x128xf32, #tpu.memory_space<vmem>>, %arg3: memref<1x2x128xi32, #tpu.memory_space<vmem>>, %arg4: memref<1x3x4x128xf32, #tpu.memory_space<vmem>>) attributes {dimension_semantics = [#tpu.dimension_semantics<parallel>, #tpu.dimension_semantics<arbitrary>], iteration_bounds = array<i64: 2, 1>, scalar_prefetch = 0 : i64, scratch_operands = 0 : i64, tpu.core_type = #tpu.core_type<tc>, window_params = [{transform_indices = @transform_0, window_bounds = array<i64: 1, 4, 2, 128>}, {transform_indices = @transform_1, window_bounds = array<i64: 1, 2, 128>}, {transform_indices = @transform_2, window_bounds = array<i64: 1, 3, 4, 128>}]} {
    %c0 = arith.constant 0 : index
    %c0_0 = arith.constant 0 : index
    %c0_1 = arith.constant 0 : index
    %c0_2 = arith.constant 0 : index
    %0 = vector.load %arg2[%c0, %c0_0, %c0_1, %c0_2] : memref<1x4x2x128xf32, #tpu.memory_space<vmem>>, vector<1x4x2x128xf32>
    %1 = vector.shape_cast %0 : vector<1x4x2x128xf32> to vector<4x2x128xf32>
    %c0_3 = arith.constant 0 : index
    %c0_4 = arith.constant 0 : index
    %c0_5 = arith.constant 0 : index
    %2 = vector.load %arg3[%c0_3, %c0_4, %c0_5] : memref<1x2x128xi32, #tpu.memory_space<vmem>>, vector<1x2x128xi32>
    %3 = vector.shape_cast %2 : vector<1x2x128xi32> to vector<2x128xi32>
    %cst = arith.constant dense<0xFF800000> : vector<2x128xf32>
    %4 = vector.multi_reduction <maximumf>, %1, %cst [0] : vector<4x2x128xf32> to vector<2x128xf32>
    %5 = vector.shape_cast %4 : vector<2x128xf32> to vector<1x2x128xf32>
    %6 = vector.broadcast %5 : vector<1x2x128xf32> to vector<4x2x128xf32>
    %7 = arith.subf %1, %6 : vector<4x2x128xf32>
    %8 = math.exp %7 : vector<4x2x128xf32>
    %cst_6 = arith.constant dense<0.000000e+00> : vector<2x128xf32>
    %9 = vector.multi_reduction <add>, %8, %cst_6 [0] : vector<4x2x128xf32> to vector<2x128xf32>
    %10 = vector.shape_cast %9 : vector<2x128xf32> to vector<1x2x128xf32>
    %cst_7 = arith.constant 1.000000e+00 : f32
    %11 = vector.broadcast %cst_7 : f32 to vector<1x2x128xf32>
    %12 = arith.divf %11, %10 : vector<1x2x128xf32>
    %13 = vector.broadcast %12 : vector<1x2x128xf32> to vector<4x2x128xf32>
    %14 = arith.mulf %8, %13 : vector<4x2x128xf32>
    %15 = tpu.iota {dimensions = array<i32: 0>} : vector<4x2x128xi32>
    %16 = vector.shape_cast %3 : vector<2x128xi32> to vector<1x2x128xi32>
    %17 = vector.broadcast %16 : vector<1x2x128xi32> to vector<4x2x128xi32>
    %18 = arith.cmpi eq, %17, %15 : vector<4x2x128xi32>
    %19 = arith.extui %18 : vector<4x2x128xi1> to vector<4x2x128xi32>
    %20 = arith.sitofp %19 : vector<4x2x128xi32> to vector<4x2x128xf32>
    %cst_8 = arith.constant 0.000000e+00 : f32
    %21 = vector.broadcast %cst_8 : f32 to vector<4x2x128xf32>
    %22 = arith.select %18, %14, %21 : vector<4x2x128xi1>, vector<4x2x128xf32>
    %cst_9 = arith.constant dense<0.000000e+00> : vector<4x128xf32>
    %23 = vector.multi_reduction <add>, %22, %cst_9 [1] : vector<4x2x128xf32> to vector<4x128xf32>
    %cst_10 = arith.constant dense<0.000000e+00> : vector<4x128xf32>
    %24 = vector.multi_reduction <add>, %14, %cst_10 [1] : vector<4x2x128xf32> to vector<4x128xf32>
    %cst_11 = arith.constant dense<0.000000e+00> : vector<4x128xf32>
    %25 = vector.multi_reduction <add>, %20, %cst_11 [1] : vector<4x2x128xf32> to vector<4x128xf32>
    %c0_i32 = arith.constant 0 : i32
    %26 = arith.cmpi eq, %arg1, %c0_i32 : i32
    %27 = arith.extui %26 : i1 to i32
    %c0_i32_12 = arith.constant 0 : i32
    %28 = arith.cmpi ne, %27, %c0_i32_12 : i32
    scf.if %28 {
      %cst_35 = arith.constant 0.000000e+00 : f32
      %47 = vector.broadcast %cst_35 : f32 to vector<1x3x4x128xf32>
      %c0_36 = arith.constant 0 : index
      %c0_37 = arith.constant 0 : index
      %c0_38 = arith.constant 0 : index
      %c0_39 = arith.constant 0 : index
      %48 = vector.load %arg4[%c0_36, %c0_37, %c0_38, %c0_39] : memref<1x3x4x128xf32, #tpu.memory_space<vmem>>, vector<1x3x4x128xf32>
      tpu.vector_store %arg4[%c0_36, %c0_37, %c0_38, %c0_39], %47 {strides = array<i32>} : memref<1x3x4x128xf32, #tpu.memory_space<vmem>>, vector<1x3x4x128xf32>,
    } else {
    }
    %c0_13 = arith.constant 0 : index
    %c0_14 = arith.constant 0 : index
    %c0_15 = arith.constant 0 : index
    %c0_16 = arith.constant 0 : index
    %29 = vector.load %arg4[%c0_13, %c0_14, %c0_15, %c0_16] : memref<1x3x4x128xf32, #tpu.memory_space<vmem>>, vector<1x1x4x128xf32>
    %30 = vector.shape_cast %29 : vector<1x1x4x128xf32> to vector<4x128xf32>
    %31 = arith.addf %30, %23 : vector<4x128xf32>
    %c0_17 = arith.constant 0 : index
    %c0_18 = arith.constant 0 : index
    %c0_19 = arith.constant 0 : index
    %c0_20 = arith.constant 0 : index
    %32 = vector.load %arg4[%c0_17, %c0_18, %c0_19, %c0_20] : memref<1x3x4x128xf32, #tpu.memory_space<vmem>>, vector<1x1x4x128xf32>
    %33 = vector.shape_cast %32 : vector<1x1x4x128xf32> to vector<4x128xf32>
    %34 = vector.shape_cast %31 : vector<4x128xf32> to vector<1x1x4x128xf32>
    tpu.vector_store %arg4[%c0_17, %c0_18, %c0_19, %c0_20], %34 {strides = array<i32>} : memref<1x3x4x128xf32, #tpu.memory_space<vmem>>, vector<1x1x4x128xf32>,
    %c0_21 = arith.constant 0 : index
    %c1 = arith.constant 1 : index
    %c0_22 = arith.constant 0 : index
    %c0_23 = arith.constant 0 : index
    %35 = vector.load %arg4[%c0_21, %c1, %c0_22, %c0_23] : memref<1x3x4x128xf32, #tpu.memory_space<vmem>>, vector<1x1x4x128xf32>
    %36 = vector.shape_cast %35 : vector<1x1x4x128xf32> to vector<4x128xf32>
    %37 = arith.addf %36, %24 : vector<4x128xf32>
    %c0_24 = arith.constant 0 : index
    %c1_25 = arith.constant 1 : index
    %c0_26 = arith.constant 0 : index
    %c0_27 = arith.constant 0 : index
    %38 = vector.load %arg4[%c0_24, %c1_25, %c0_26, %c0_27] : memref<1x3x4x128xf32, #tpu.memory_space<vmem>>, vector<1x1x4x128xf32>
    %39 = vector.shape_cast %38 : vector<1x1x4x128xf32> to vector<4x128xf32>
    %40 = vector.shape_cast %37 : vector<4x128xf32> to vector<1x1x4x128xf32>
    tpu.vector_store %arg4[%c0_24, %c1_25, %c0_26, %c0_27], %40 {strides = array<i32>} : memref<1x3x4x128xf32, #tpu.memory_space<vmem>>, vector<1x1x4x128xf32>,
    %c0_28 = arith.constant 0 : index
    %c2 = arith.constant 2 : index
    %c0_29 = arith.constant 0 : index
    %c0_30 = arith.constant 0 : index
    %41 = vector.load %arg4[%c0_28, %c2, %c0_29, %c0_30] : memref<1x3x4x128xf32, #tpu.memory_space<vmem>>, vector<1x1x4x128xf32>
    %42 = vector.shape_cast %41 : vector<1x1x4x128xf32> to vector<4x128xf32>
    %43 = arith.addf %42, %25 : vector<4x128xf32>
    %c0_31 = arith.constant 0 : index
    %c2_32 = arith.constant 2 : index
    %c0_33 = arith.constant 0 : index
    %c0_34 = arith.constant 0 : index
    %44 = vector.load %arg4[%c0_31, %c2_32, %c0_33, %c0_34] : memref<1x3x4x128xf32, #tpu.memory_space<vmem>>, vector<1x1x4x128xf32>
    %45 = vector.shape_cast %44 : vector<1x1x4x128xf32> to vector<4x128xf32>
    %46 = vector.shape_cast %43 : vector<4x128xf32> to vector<1x1x4x128xf32>
    tpu.vector_store %arg4[%c0_31, %c2_32, %c0_33, %c0_34], %46 {strides = array<i32>} : memref<1x3x4x128xf32, #tpu.memory_space<vmem>>, vector<1x1x4x128xf32>,
    return
  }
  func.func @transform_0(%arg0: i32, %arg1: i32) -> (i32, i32, i32, i32) {
    %c0_i32 = arith.constant 0 : i32
    %c0_i32_0 = arith.constant 0 : i32
    %c0_i32_1 = arith.constant 0 : i32
    return %arg0, %c0_i32, %arg1, %c0_i32_0 : i32, i32, i32, i32
  }
  func.func @transform_1(%arg0: i32, %arg1: i32) -> (i32, i32, i32) {
    %c0_i32 = arith.constant 0 : i32
    %c0_i32_0 = arith.constant 0 : i32
    return %arg0, %arg1, %c0_i32 : i32, i32, i32
  }
  func.func @transform_2(%arg0: i32, %arg1: i32) -> (i32, i32, i32, i32) {
    %c0_i32 = arith.constant 0 : i32
    %c0_i32_0 = arith.constant 0 : i32
    %c0_i32_1 = arith.constant 0 : i32
    %c0_i32_2 = arith.constant 0 : i32
    return %arg0, %c0_i32, %c0_i32_0, %c0_i32_1 : i32, i32, i32, i32
  }
}

</mosaic_0001>

<llo_original>
// kernel: tpu_custom_call.1
$region0: #{tpu_custom_call.1}
  #allocation0 [shape = 'u32[]', space=smem, size = 0x4, offset = 0x4, fixed_abs, tag = 'smem constant byte address 0x4 - core index']
  #allocation1 [shape = 'u32[144,128]{1,0:T(1,128)}', space=vmem, size = 0x12000, scoped, tag = 'internal scratch']
  %s0 = inlined_call_operand.hbm [shape: f32[2,4,2,128], index: 0, kind: input, shape index: {}]
  %s1 = inlined_call_operand.hbm [shape: s32[2,2,128], index: 1, kind: input, shape index: {}]
  %s2 = inlined_call_operand.hbm [shape: f32[2,3,4,128], index: 2, kind: output, shape index: {}]
  %s3 = sld [smem:[#allocation0]]
  $region53: #{tpu_custom_call.1} parent=0
    _
  %s5 = ssub.s32 1, %s3
  %s6 = scalar_select 0, %s5, %s3
  $region1: #{tpu_custom_call.1} parent=0
    #allocation2 [shape = 'u8[8192]{0}', space=vmem, size = 0x2000, scoped, tag = 'input window, operand 0']
    #allocation3 [shape = 's32[2]{0}', space=sflag, size = 0x8, scoped, tag = 'scoped memory for tpu_custom_call.1']
    #allocation4 [shape = 's32[2]{0}', space=sflag, size = 0x8, scoped, tag = 'scoped memory for tpu_custom_call.1']
    #allocation5 [shape = 'u8[2048]{0}', space=vmem, size = 0x800, scoped, tag = 'input window, operand 1']
    #allocation6 [shape = 's32[2]{0}', space=sflag, size = 0x8, scoped, tag = 'scoped memory for tpu_custom_call.1']
    #allocation7 [shape = 'u8[12288]{0}', space=vmem, size = 0x3000, scoped, tag = 'output window, operand 0']
    %7 = vsyncpa [#allocation3], 0
    %s8 = scalar_lea.sflag [#allocation3], 1
    %9 = vsyncpa %s8, 0
    %10 = vsyncpa [#allocation6], 0
    %s11 = scalar_lea.sflag [#allocation6], 1
    %12 = vsyncpa %s11, 0
    %13 = vsyncpa [#allocation4], 0
    %s14 = scalar_lea.sflag [#allocation4], 1
    %15 = vsyncpa %s14, 0
    loop: start=0, step=1, limit=4
    $region2: #{tpu_custom_call.1} parent=1 // loop_pre_header
      _
    $region3: #{tpu_custom_call.1} parent=1 // loop_header
      %s17 = sphi 0, %s21
      %p18 = scmp.ge.s32.totalorder %s17, 4
      %s24 = sphi 0, %s36
      %s25 = sphi 0, %s32
      %s26 = sphi 0, %s24
      %s27 = sphi 0, %s25
      %s28 = sphi 0, %s26
      %s29 = sphi 0, %s27
      %s41 = sphi 0, %s43
      %s44 = sphi 0, %s41
      %s45 = sphi 0, %s44
      %s61 = sphi 0, %s45
      %s69 = sphi 0, %s71
      %s72 = sphi 0, %s69
      %s73 = sphi 0, %s72
      %s89 = sphi 0, %s73
      %s95 = sphi 0, %s97
      %s98 = sphi 0, %s95
      %s99 = sphi 0, %s98
      %s115 = sphi 0, %s99
    $region4: #{tpu_custom_call.1} parent=1 // loop_header_branch
      %20 = sbr.rel (%p18) target = $region8
    $region5: #{tpu_custom_call.1} parent=1 // loop_body
      %s22 = ssub.s32 %s17, 1
      %s23 = ssub.s32 %s17, 2
      %s30 = sadd.s32 1, %s25
      %p31 = scmp.ge.s32.totalorder %s30, 1
      %s32 = scalar_select %p31, 0, %s30
      %s33 = sadd.s32 1, %s24
      %s34 = scalar_select %p31, %s33, %s24
      %p35 = scmp.ge.s32.totalorder %s34, 2
      %s36 = scalar_select %p35, 0, %s34
      %s37 = ssub.s32 %s24, %s36
      %s38 = ssub.s32 %s25, %s32
      %s39 = sor.u32 %s37, %s38
      %p40 = scmp.eq.s32.totalorder %s39, 0
      %s42 = sadd.s32 %s41, 1
      %s43 = scalar_select %p40, %s41, %s42
      %p46 = pneg %p40
      %p47 = scmp.eq.s32.totalorder %s17, 1
      %p48 = por %p46, %p47
      %p49 = scmp.ne.s32.totalorder %s41, %s44
      %p50 = scmp.eq.s32.totalorder %s17, 0
      %p51 = por %p49, %p50
      %p52 = scmp.ne.s32.totalorder %s41, %s44
      %p53 = scmp.eq.s32.totalorder %s22, 1
      %p54 = por %p52, %p53
      %p55 = scmp.ne.s32.totalorder %s44, %s45
      %p56 = scmp.eq.s32.totalorder %s22, 0
      %p57 = por %p55, %p56
      %p58 = scmp.ne.s32.totalorder %s44, %s45
      %p59 = scmp.eq.s32.totalorder %s23, 1
      %p60 = por %p58, %p59
      %p62 = scmp.ne.s32.totalorder %s45, %s61
      %p63 = scmp.eq.s32.totalorder %s23, 0
      %p64 = por %p62, %p63
      %s65 = ssub.s32 %s24, %s36
      %s66 = ssub.s32 %s25, %s32
      %s67 = sor.u32 %s65, %s66
      %p68 = scmp.eq.s32.totalorder %s67, 0
      %s70 = sadd.s32 %s69, 1
      %s71 = scalar_select %p68, %s69, %s70
      %p74 = pneg %p68
      %p75 = scmp.eq.s32.totalorder %s17, 1
      %p76 = por %p74, %p75
      %p77 = scmp.ne.s32.totalorder %s69, %s72
      %p78 = scmp.eq.s32.totalorder %s17, 0
      %p79 = por %p77, %p78
      %p80 = scmp.ne.s32.totalorder %s69, %s72
      %p81 = scmp.eq.s32.totalorder %s22, 1
      %p82 = por %p80, %p81
      %p83 = scmp.ne.s32.totalorder %s72, %s73
      %p84 = scmp.eq.s32.totalorder %s22, 0
      %p85 = por %p83, %p84
      %p86 = scmp.ne.s32.totalorder %s72, %s73
      %p87 = scmp.eq.s32.totalorder %s23, 1
      %p88 = por %p86, %p87
      %p90 = scmp.ne.s32.totalorder %s73, %s89
      %p91 = scmp.eq.s32.totalorder %s23, 0
      %p92 = por %p90, %p91
      %s93 = ssub.s32 %s24, %s36
      %p94 = scmp.eq.s32.totalorder %s93, 0
      %s96 = sadd.s32 %s95, 1
      %s97 = scalar_select %p94, %s95, %s96
      %p100 = pneg %p94
      %p101 = scmp.eq.s32.totalorder %s17, 1
      %p102 = por %p100, %p101
      %p103 = scmp.ne.s32.totalorder %s95, %s98
      %p104 = scmp.eq.s32.totalorder %s17, 0
      %p105 = por %p103, %p104
      %p106 = scmp.ne.s32.totalorder %s95, %s98
      %p107 = scmp.eq.s32.totalorder %s22, 1
      %p108 = por %p106, %p107
      %p109 = scmp.ne.s32.totalorder %s98, %s99
      %p110 = scmp.eq.s32.totalorder %s22, 0
      %p111 = por %p109, %p110
      %p112 = scmp.ne.s32.totalorder %s98, %s99
      %p113 = scmp.eq.s32.totalorder %s23, 1
      %p114 = por %p112, %p113
      %p116 = scmp.ne.s32.totalorder %s99, %s115
      %p117 = scmp.eq.s32.totalorder %s23, 0
      %p118 = por %p116, %p117
      %p119 = scmp.le.s32.totalorder 1, %s17
      %p120 = scmp.lt.s32.totalorder %s17, 3
      %p121 = pnand %p119, %p120
      %p122 = pneg %p121
      // Predicated region
      $region9: #{tpu_custom_call.1} parent=5 // pred_check
        _
      $region10: #{tpu_custom_call.1} parent=5 // pred_check_branch
        %124 = sbr.rel (%p121) target = $region12
      $region11: #{tpu_custom_call.1} parent=5 // pred_region
        %s125 = ssub.s32 %s17, 1
      $region12: #{tpu_custom_call.1} parent=5 // pred_fallthru
        _
      %p126 = scmp.lt.s32.totalorder %s17, 2
      // Predicated region
      $region13: #{tpu_custom_call.1} parent=5 // pred_check
        %p127 = pneg %p126
      $region14: #{tpu_custom_call.1} parent=5 // pred_check_branch
        %129 = sbr.rel (%p127) target = $region16
      $region15: #{tpu_custom_call.1} parent=5 // pred_region
        // Predicated region
        $region17: #{tpu_custom_call.1} parent=15 // pred_check
          %p130 = pneg %p51
        $region18: #{tpu_custom_call.1} parent=15 // pred_check_branch
          %132 = sbr.rel (%p130) target = $region20
        $region19: #{tpu_custom_call.1} parent=15 // pred_region
          %s133 = sand.u32 %s41, 1
          %s134 = scalar_lea.sflag [#allocation3], %s133
          %s135 = sand.u32 %s41, 1
          %s136 = smul.addr %s135, 8
          %s137 = scalar_lea.vmem [#allocation2], %s136
          %s139 = ssub.s32 128, 128
          %140 = vsyncadd %s134, %s139
          %s141 = smul.addr %s24, 4
          %s142 = sadd.s32 %s25, %s141
          %s143 = smul.addr %s142, 32
          %s144 = scalar_lea.hbm %s0, %s143
          %s145 = sshll.u32 %s137, 4
          %s146 = int_to_ptr.vmem [resolvable:$true] %s145
          %151 = dma.hbm_to_vmem [thread:$0]  %s144, 128, %s146, %s134, 32, 32, 2
        $region20: #{tpu_custom_call.1} parent=15 // pred_fallthru
          _
        // Predicated region
        $region21: #{tpu_custom_call.1} parent=15 // pred_check
          %p152 = pneg %p79
        $region22: #{tpu_custom_call.1} parent=15 // pred_check_branch
          %154 = sbr.rel (%p152) target = $region24
        $region23: #{tpu_custom_call.1} parent=15 // pred_region
          %s155 = sand.u32 %s69, 1
          %s156 = scalar_lea.sflag [#allocation6], %s155
          %s157 = sand.u32 %s69, 1
          %s158 = smul.addr %s157, 2
          %s159 = scalar_lea.vmem [#allocation5], %s158
          %s161 = ssub.s32 32, 32
          %162 = vsyncadd %s156, %s161
          %s163 = sadd.s32 %s25, %s24
          %s164 = smul.addr %s163, 32
          %s165 = scalar_lea.hbm %s1, %s164
          %s167 = sshll.u32 %s159, 4
          %s168 = int_to_ptr.vmem [resolvable:$true] %s167
          %170 = dma.hbm_to_vmem [thread:$0]  %s165, 32, %s168, %s156
        $region24: #{tpu_custom_call.1} parent=15 // pred_fallthru
          _
      $region16: #{tpu_custom_call.1} parent=5 // pred_fallthru
        _
      %p171 = scmp.le.s32.totalorder 1, %s17
      %p172 = scmp.lt.s32.totalorder %s17, 3
      %p173 = pnand %p171, %p172
      %p174 = pneg %p173
      // Predicated region
      $region25: #{tpu_custom_call.1} parent=5 // pred_check
        _
      $region26: #{tpu_custom_call.1} parent=5 // pred_check_branch
        %176 = sbr.rel (%p173) target = $region28
      $region27: #{tpu_custom_call.1} parent=5 // pred_region
        %s177 = ssub.s32 %s17, 1
        %s178 = sand.u32 %s44, 1
        %s179 = scalar_lea.sflag [#allocation3], %s178
        %s180 = sand.u32 %s44, 1
        %s181 = smul.addr %s180, 8
        %s182 = scalar_lea.vmem [#allocation2], %s181
        // Predicated region
        $region29: #{tpu_custom_call.1} parent=27 // pred_check
          %p183 = pneg %p57
        $region30: #{tpu_custom_call.1} parent=27 // pred_check_branch
          %185 = sbr.rel (%p183) target = $region32
        $region31: #{tpu_custom_call.1} parent=27 // pred_region
          %186 = dma.done %s179, 128
        $region32: #{tpu_custom_call.1} parent=27 // pred_fallthru
          _
        %s187 = sand.u32 %s72, 1
        %s188 = scalar_lea.sflag [#allocation6], %s187
        %s189 = sand.u32 %s72, 1
        %s190 = smul.addr %s189, 2
        %s191 = scalar_lea.vmem [#allocation5], %s190
        // Predicated region
        $region33: #{tpu_custom_call.1} parent=27 // pred_check
          %p192 = pneg %p85
        $region34: #{tpu_custom_call.1} parent=27 // pred_check_branch
          %194 = sbr.rel (%p192) target = $region36
        $region35: #{tpu_custom_call.1} parent=27 // pred_region
          %195 = dma.done %s188, 32
        $region36: #{tpu_custom_call.1} parent=27 // pred_fallthru
          _
        %s196 = sand.u32 %s44, 1
        %s197 = scalar_lea.sflag [#allocation3], %s196
        %s198 = sand.u32 %s44, 1
        %s199 = smul.addr %s198, 8
        %s200 = scalar_lea.vmem [#allocation2], %s199
        %p201 = pneg %p57
        %p202 = pneg %p54
        %s203 = sand.u32 %s72, 1
        %s204 = scalar_lea.sflag [#allocation6], %s203
        %s205 = sand.u32 %s72, 1
        %s206 = smul.addr %s205, 2
        %s207 = scalar_lea.vmem [#allocation5], %s206
        %p208 = pneg %p85
        %p209 = pneg %p82
        %p210 = pneg %p111
        %p211 = pneg %p108
        %s212 = sand.u32 %s98, 1
        %s213 = scalar_lea.sflag [#allocation4], %s212
        %s214 = sand.u32 %s98, 1
        %s215 = smul.addr %s214, 12
        %s216 = scalar_lea.vmem [#allocation7], %s215
        %v217 = vld [vmem:[%s182] sm:$0x3]
        %v218 = vld [vmem:[%s182 + $0x2] sm:$0x3]
        %v219 = vld [vmem:[%s182 + $0x4] sm:$0x3]
        %v220 = vld [vmem:[%s182 + $0x6] sm:$0x3]
        %v221 = vld [vmem:[%s191] sm:$0x3]
        %vm222 = vcmask 1041408
        %v223 = vsel %vm222, %v217, -inf
        %v224 = vsel %vm222, %v218, -inf
        %v225 = vsel %vm222, %v219, -inf
        %v226 = vsel %vm222, %v220, -inf
        %v227 = vmax.f32 %v223, %v224
        %v228 = vmax.f32 %v225, %v226
        %v229 = vmax.f32 %v227, %v228
        %v230 = vsub.f32 %v217, %v229
        %v231 = vsub.f32 %v218, %v229
        %v232 = vsub.f32 %v219, %v229
        %v233 = vsub.f32 %v220, %v229
        %v234 = vmul.f32 %v230, 1.442695
        %v235 = vpow.pop %v234
        %v236 = vmul.f32 %v231, 1.442695
        %v237 = vpow.pop %v236
        %v238 = vmul.f32 %v232, 1.442695
        %v239 = vpow.pop %v238
        %v240 = vmul.f32 %v233, 1.442695
        %v241 = vpow.pop %v240
        %v242 = vsel %vm222, %v235, 0.0
        %v243 = vsel %vm222, %v237, 0.0
        %v244 = vadd.f32 %v242, %v243
        %v245 = vsel %vm222, %v239, 0.0
        %v246 = vadd.f32 %v244, %v245
        %v247 = vsel %vm222, %v241, 0.0
        %v248 = vadd.f32 %v246, %v247
        %v249 = vrcp.pop %v248
        %v250 = vmul.f32 1.0, %v249
        %v251 = vmul.f32 %v235, %v250
        %v252 = vmul.f32 %v237, %v250
        %v253 = vmul.f32 %v239, %v250
        %v254 = vmul.f32 %v241, %v250
        %vm255 = vcmp.eq.s32.totalorder %v221, 0
        %vm256 = vcmp.eq.s32.totalorder %v221, 1
        %vm257 = vcmp.eq.s32.totalorder %v221, 2
        %vm258 = vcmp.eq.s32.totalorder %v221, 3
        %v259 = vsel %vm255, 1, 0
        %v260 = vsel %vm256, 1, 0
        %v261 = vsel %vm257, 1, 0
        %v262 = vsel %vm258, 1, 0
        %v263 = vcvt.s32.f32 %v259
        %v264 = vcvt.s32.f32 %v260
        %v265 = vcvt.s32.f32 %v261
        %v266 = vcvt.s32.f32 %v262
        %v267 = vsel %vm255, %v251, 0.0
        %v268 = vsel %vm256, %v252, 0.0
        %v269 = vsel %vm257, %v253, 0.0
        %v270 = vsel %vm258, %v254, 0.0
        %v271 = vsel %vm222, %v267, 0.0
        %v272 = vrot.slane %v271, 4
        %v273 = vadd.f32 %v271, %v272
        %v274 = vrot.slane %v273, 2
        %v275 = vadd.f32 %v273, %v274
        %v276 = vrot.slane %v275, 1
        %v277 = vadd.f32 %v275, %v276
        %v278 = vsel %vm222, %v268, 0.0
        %v279 = vrot.slane %v278, 4
        %v280 = vadd.f32 %v278, %v279
        %v281 = vrot.slane %v280, 2
        %v282 = vadd.f32 %v280, %v281
        %v283 = vrot.slane %v282, 1
        %v284 = vadd.f32 %v282, %v283
        %v285 = vsel %vm222, %v269, 0.0
        %v286 = vrot.slane %v285, 4
        %v287 = vadd.f32 %v285, %v286
        %v288 = vrot.slane %v287, 2
        %v289 = vadd.f32 %v287, %v288
        %v290 = vrot.slane %v289, 1
        %v291 = vadd.f32 %v289, %v290
        %v292 = vsel %vm222, %v270, 0.0
        %v293 = vrot.slane %v292, 4
        %v294 = vadd.f32 %v292, %v293
        %v295 = vrot.slane %v294, 2
        %v296 = vadd.f32 %v294, %v295
        %v297 = vrot.slane %v296, 1
        %v298 = vadd.f32 %v296, %v297
        %v299 = vsel %vm222, %v251, 0.0
        %v300 = vrot.slane %v299, 4
        %v301 = vadd.f32 %v299, %v300
        %v302 = vrot.slane %v301, 2
        %v303 = vadd.f32 %v301, %v302
        %v304 = vrot.slane %v303, 1
        %v305 = vadd.f32 %v303, %v304
        %v306 = vsel %vm222, %v252, 0.0
        %v307 = vrot.slane %v306, 4
        %v308 = vadd.f32 %v306, %v307
        %v309 = vrot.slane %v308, 2
        %v310 = vadd.f32 %v308, %v309
        %v311 = vrot.slane %v310, 1
        %v312 = vadd.f32 %v310, %v311
        %v313 = vsel %vm222, %v253, 0.0
        %v314 = vrot.slane %v313, 4
        %v315 = vadd.f32 %v313, %v314
        %v316 = vrot.slane %v315, 2
        %v317 = vadd.f32 %v315, %v316
        %v318 = vrot.slane %v317, 1
        %v319 = vadd.f32 %v317, %v318
        %v320 = vsel %vm222, %v254, 0.0
        %v321 = vrot.slane %v320, 4
        %v322 = vadd.f32 %v320, %v321
        %v323 = vrot.slane %v322, 2
        %v324 = vadd.f32 %v322, %v323
        %v325 = vrot.slane %v324, 1
        %v326 = vadd.f32 %v324, %v325
        %v327 = vsel %vm222, %v263, 0.0
        %v328 = vrot.slane %v327, 4
        %v329 = vadd.f32 %v327, %v328
        %v330 = vrot.slane %v329, 2
        %v331 = vadd.f32 %v329, %v330
        %v332 = vrot.slane %v331, 1
        %v333 = vadd.f32 %v331, %v332
        %v334 = vsel %vm222, %v264, 0.0
        %v335 = vrot.slane %v334, 4
        %v336 = vadd.f32 %v334, %v335
        %v337 = vrot.slane %v336, 2
        %v338 = vadd.f32 %v336, %v337
        %v339 = vrot.slane %v338, 1
        %v340 = vadd.f32 %v338, %v339
        %v341 = vsel %vm222, %v265, 0.0
        %v342 = vrot.slane %v341, 4
        %v343 = vadd.f32 %v341, %v342
        %v344 = vrot.slane %v343, 2
        %v345 = vadd.f32 %v343, %v344
        %v346 = vrot.slane %v345, 1
        %v347 = vadd.f32 %v345, %v346
        %v348 = vsel %vm222, %v266, 0.0
        %v349 = vrot.slane %v348, 4
        %v350 = vadd.f32 %v348, %v349
        %v351 = vrot.slane %v350, 2
        %v352 = vadd.f32 %v350, %v351
        %v353 = vrot.slane %v352, 1
        %v354 = vadd.f32 %v352, %v353
        %p355 = scmp.eq.s32.totalorder %s27, 0
        // Predicated region
        $region37: #{tpu_custom_call.1} parent=27 // pred_check
          %p356 = pneg %p355
        $region38: #{tpu_custom_call.1} parent=27 // pred_check_branch
          %358 = sbr.rel (%p356) target = $region40
        $region39: #{tpu_custom_call.1} parent=27 // pred_region
          %359 = vst [vmem:[%s216] sm:$0xf] 0.0
          %360 = vst [vmem:[%s216 + $0x4] sm:$0xf] 0.0
          %361 = vst [vmem:[%s216 + $0x8] sm:$0xf] 0.0
        $region40: #{tpu_custom_call.1} parent=27 // pred_fallthru
          _
        %v362 = vld [vmem:[%s216] sm:$0xf]
        %vm367 = vcmask 1041409
        %v368 = vsel %vm367, %v284, %v277
        %vm369 = vcmask 1042434
        %v370 = vsel %vm369, %v291, %v368
        %vm371 = vcmask 1043459
        %v372 = vsel %vm371, %v298, %v370
        %v374 = vadd.f32 %v362, %v372
        %375 = vst [vmem:[%s216] sm:$0xf] %v374
        %s376 = scalar_lea.vmem %s216, 4 [#allocation7]
        %v377 = vld [vmem:[%s376] sm:$0xf]
        %v382 = vsel %vm367, %v312, %v305
        %v383 = vsel %vm369, %v319, %v382
        %v384 = vsel %vm371, %v326, %v383
        %v386 = vadd.f32 %v377, %v384
        %387 = vst [vmem:[%s376] sm:$0xf] %v386
        %s388 = scalar_lea.vmem %s216, 8 [#allocation7]
        %v389 = vld [vmem:[%s388] sm:$0xf]
        %v394 = vsel %vm367, %v340, %v333
        %v395 = vsel %vm369, %v347, %v394
        %v396 = vsel %vm371, %v354, %v395
        %v398 = vadd.f32 %v389, %v396
        %399 = vst [vmem:[%s388] sm:$0xf] %v398
        %s400 = sand.u32 %s98, 1
        %s401 = scalar_lea.sflag [#allocation4], %s400
        %s402 = sand.u32 %s98, 1
        %s403 = smul.addr %s402, 12
        %s404 = scalar_lea.vmem [#allocation7], %s403
        // Predicated region
        $region41: #{tpu_custom_call.1} parent=27 // pred_check
          %p405 = pneg %p108
        $region42: #{tpu_custom_call.1} parent=27 // pred_check_branch
          %407 = sbr.rel (%p405) target = $region44
        $region43: #{tpu_custom_call.1} parent=27 // pred_region
          %s409 = ssub.s32 192, 192
          %410 = vsyncadd %s401, %s409
          %s411 = smul.addr %s26, 3
          %s412 = smul.addr %s411, 64
          %s413 = scalar_lea.hbm %s2, %s412
          %s414 = sshll.u32 %s404, 4
          %s415 = int_to_ptr.vmem [resolvable:$true] %s414
          %420 = dma.vmem_to_hbm [thread:$0]  %s415, 192, %s413, %s401, 64, 64, 4
        $region44: #{tpu_custom_call.1} parent=27 // pred_fallthru
          _
      $region28: #{tpu_custom_call.1} parent=5 // pred_fallthru
        _
      %p421 = scmp.le.s32.totalorder 2, %s17
      // Predicated region
      $region45: #{tpu_custom_call.1} parent=5 // pred_check
        %p422 = pneg %p421
      $region46: #{tpu_custom_call.1} parent=5 // pred_check_branch
        %424 = sbr.rel (%p422) target = $region48
      $region47: #{tpu_custom_call.1} parent=5 // pred_region
        %s425 = ssub.s32 %s17, 2
        // Predicated region
        $region49: #{tpu_custom_call.1} parent=47 // pred_check
          %p426 = pneg %p114
        $region50: #{tpu_custom_call.1} parent=47 // pred_check_branch
          %428 = sbr.rel (%p426) target = $region52
        $region51: #{tpu_custom_call.1} parent=47 // pred_region
          %s429 = sand.u32 %s99, 1
          %s430 = scalar_lea.sflag [#allocation4], %s429
          %s431 = sand.u32 %s99, 1
          %s432 = smul.addr %s431, 12
          %s433 = scalar_lea.vmem [#allocation7], %s432
          %434 = dma.done %s430, 192
        $region52: #{tpu_custom_call.1} parent=47 // pred_fallthru
          _
      $region48: #{tpu_custom_call.1} parent=5 // pred_fallthru
        _
    $region6: #{tpu_custom_call.1} parent=1 // loop_footer
      %s21 = sadd.s32 1, %s17
    $region7: #{tpu_custom_call.1} parent=1 // loop_footer_branch
      %16 = sbr.rel target = $region3
    $region8: #{tpu_custom_call.1} parent=1 // loop_exit
      _
    %435 = vsyncpa [#allocation3], 1
    %s436 = scalar_lea.sflag [#allocation3], 1
    %437 = vsyncpa %s436, 1
    %438 = vsyncpa [#allocation6], 1
    %s439 = scalar_lea.sflag [#allocation6], 1
    %440 = vsyncpa %s439, 1
    %441 = vsyncpa [#allocation4], 1
    %s442 = scalar_lea.sflag [#allocation4], 1
    %443 = vsyncpa %s442, 1

</llo_original>
